<compile_context>
chip_gen: v7x
topology: tpu7x:2x2x1
jax: 0.10.0
libtpu: 0.0.40
codegen_flags: <defaults>
</compile_context>

<pallas_src>
import functools

import jax
import jax.numpy as jnp
from jax.experimental import pallas as pl
from jax.experimental.pallas import tpu as pltpu


def _round_up(n, m):
    return ((n + m - 1) // m) * m


def _cdiv(a, b):
    return (a + b - 1) // b


# --------------------------------------------------------------------------- #
# Kernel: two fused matmuls (layer-1 fused across branches, layer-2
# block-diagonal across branches), ReLU in between, lane-exact packed output.
# bf16 MXU operands, f32 accumulation, f32 elementwise.
# --------------------------------------------------------------------------- #
def _generator_kernel(x_ref, win_ref, bin_ref, wout_ref, bout_ref, o_ref):
    # Cast activations to the weight dtype (bf16 by default) right before each
    # dot so the MXU runs in bf16; accumulate in f32.
    x = x_ref[...].astype(win_ref.dtype)

    # fused first layer: [TB, z] @ [z, 2*HP]  -> bias add + ReLU in f32
    h = jnp.dot(x, win_ref[...], preferred_element_type=jnp.float32)
    h = jnp.maximum(h + bin_ref[...], 0.0)

    # fused (block-diagonal) second layer: [TB, 2*HP] @ [2*HP, NOUT]
    h = h.astype(wout_ref.dtype)
    out = jnp.dot(h, wout_ref[...], preferred_element_type=jnp.float32)
    o_ref[...] = (out + bout_ref[...]).astype(o_ref.dtype)


# --------------------------------------------------------------------------- #
# Wrapper
# --------------------------------------------------------------------------- #
def generator_w1b_2layer(x, packed, obs_size, n_actions):
    """x: [B, z] -> (weights [B, n_actions, obs_size], bias [B, n_actions])."""
    w_in, b_in, w_out, b_out = packed
    B, Z = x.shape
    NOUT = w_out.shape[1]                 # = obs_size * n_actions + n_actions
    OW = obs_size * n_actions

    # Batch tiling.
    #  * TB multiple of 8, up to 1024 (weights resident ~0.3 MiB bf16; even
    #    TB=1024 tiles + intermediates stay well under 32 MiB on all chips).
    #  * Guarantee >= 2 grid steps for mid-size batches so the "parallel" axis
    #    shards across both TensorCores on v7x.
    TB_MAX = 1024
    if B <= TB_MAX:
        n_steps = 2
        TB = _round_up(max(_cdiv(B, n_steps), 1), 8)
        B_pad = TB * n_steps
    else:
        TB = TB_MAX
        B_pad = _round_up(B, TB)
    if B_pad != B:
        x = jnp.pad(x, ((0, B_pad - B), (0, 0)))

    grid = (B_pad // TB,)
    resident = lambda i: (0, 0)  # constant index_map -> weights fetched once

    out = pl.pallas_call(
        _generator_kernel,
        out_shape=jax.ShapeDtypeStruct((B_pad, NOUT), jnp.float32),
        grid=grid,
        in_specs=[
            pl.BlockSpec((TB, Z), lambda i: (i, 0)),      # x tile
            pl.BlockSpec(w_in.shape, resident),           # fused layer-1 weight
            pl.BlockSpec(b_in.shape, resident),           # fused layer-1 bias
            pl.BlockSpec(w_out.shape, resident),          # fused layer-2 weight
            pl.BlockSpec(b_out.shape, resident),          # fused layer-2 bias
        ],
        out_specs=pl.BlockSpec((TB, NOUT), lambda i: (i, 0)),
        compiler_params=pltpu.CompilerParams(
            dimension_semantics=("parallel",),            # shard batch across TCs (v7x)
            vmem_limit_bytes=32 << 20,                    # v7x-safe headroom
        ),
    )(x, w_in, b_in, w_out, b_out)

    # Unpack: weight branch (first OW lanes) then bias branch (next n_actions).
    weights = out[:B, :OW].reshape(B, n_actions, obs_size)
    bias = out[:B, OW:OW + n_actions]
    return weights, bias


# --------------------------------------------------------------------------- #
# Parameter init (matches torch.nn.Linear fan-in uniform init, stored as
# W^T [in, out] / b [1, out]) and packing into the fused/padded layout.
# --------------------------------------------------------------------------- #
def init_params(key, z, obs_size, n_actions, hidden=200):
    ks = jax.random.split(key, 8)

    def linear(kw, kb, fan_in, fan_out):
        bound = 1.0 / jnp.sqrt(fan_in)
        w = jax.random.uniform(kw, (fan_in, fan_out), jnp.float32, -bound, bound)
        b = jax.random.uniform(kb, (1, fan_out), jnp.float32, -bound, bound)
        return w, b

    w1, b1 = linear(ks[0], ks[1], z, hidden)                     # linear1
    w2, b2 = linear(ks[2], ks[3], hidden, obs_size * n_actions)  # linear2
    wb1, bb1 = linear(ks[4], ks[5], z, hidden)                   # bias1
    wb2, bb2 = linear(ks[6], ks[7], hidden, n_actions)           # bias2
    return (w1, b1, w2, b2, wb1, bb1, wb2, bb2)


def pack_params(params, z, obs_size, n_actions, hidden=200,
                param_dtype=jnp.bfloat16):
    """Fuse + zero-pad the 4 Linears into 2 lane-aligned matmul operands.

    Weights are stored in `param_dtype` (default bf16 -> real MXU speedup since
    the kernel casts activations to the same dtype); biases stay f32 because
    the bias-add / ReLU run on the f32 accumulator.
    """
    w1, b1, w2, b2, wb1, bb1, wb2, bb2 = params
    OW = obs_size * n_actions
    HP = _round_up(hidden, 128)     # 200 -> 256: dense vregs / MXU tiles
    NOUT = OW + n_actions           # exact packed output width (136): less writeback

    # Fused first-layer weight/bias: [z, 2*HP], [1, 2*HP]
    w_in = jnp.zeros((z, 2 * HP), jnp.float32)
    w_in = w_in.at[:, :hidden].set(w1)
    w_in = w_in.at[:, HP:HP + hidden].set(wb1)
    b_in = jnp.zeros((1, 2 * HP), jnp.float32)
    b_in = b_in.at[:, :hidden].set(b1)
    b_in = b_in.at[:, HP:HP + hidden].set(bb1)

    # Block-diagonal second-layer weight/bias: [2*HP, NOUT], [1, NOUT]
    w_out = jnp.zeros((2 * HP, NOUT), jnp.float32)
    w_out = w_out.at[:hidden, :OW].set(w2)
    w_out = w_out.at[HP:HP + hidden, OW:OW + n_actions].set(wb2)
    b_out = jnp.zeros((1, NOUT), jnp.float32)
    b_out = b_out.at[:, :OW].set(b2)
    b_out = b_out.at[:, OW:OW + n_actions].set(bb2)

    return (w_in.astype(param_dtype), b_in.astype(jnp.float32),
            w_out.astype(param_dtype), b_out.astype(jnp.float32))


# --------------------------------------------------------------------------- #
# Pure-JAX reference (unfused, unpadded, full f32)
# --------------------------------------------------------------------------- #
def _reference(x, params, obs_size, n_actions):
    (w1, b1, w2, b2, wb1, bb1, wb2, bb2) = params
    h = jnp.maximum(x @ w1 + b1, 0.0)
    w = (h @ w2 + b2).reshape(x.shape[0], n_actions, obs_size)
    hb = jnp.maximum(x @ wb1 + bb1, 0.0)
    b = hb @ wb2 + bb2
    return w, b


if __name__ == "__main__":
    # Small shapes consistent with the module: z (latent) = 32, hidden = 200,
    # obs_size = 16, n_actions = 8, batch = 2.
    B, Z, OBS, NA = 2, 32, 16, 8

    key = jax.random.PRNGKey(0)
    k_x, k_p = jax.random.split(key)
    x = jax.random.normal(k_x, (B, Z), jnp.float32)
    params = init_params(k_p, Z, OBS, NA)
    packed = pack_params(params, Z, OBS, NA)           # bf16 weights by default

    run = jax.jit(functools.partial(generator_w1b_2layer,
                                    obs_size=OBS, n_actions=NA))
    weights, bias = run(x, packed)
    weights = jax.block_until_ready(weights)
    bias = jax.block_until_ready(bias)

    # correctness check against pure-f32 reference (bf16 MXU operands -> loose tol)
    w_ref, b_ref = _reference(x, params, OBS, NA)
    assert weights.shape == (B, NA, OBS) and bias.shape == (B, NA)
    assert jnp.allclose(weights, w_ref, atol=2e-2, rtol=2e-2)
    assert jnp.allclose(bias, b_ref, atol=2e-2, rtol=2e-2)

    print("KERNEL_OK")
</pallas_src>

<mosaic_0001>
module attributes {stable_mosaic.version = 11 : i64} {
  func.func @_generator_kernel(%arg0: i32, %arg1: memref<8x32xf32, #tpu.memory_space<vmem>>, %arg2: memref<32x512xbf16, #tpu.memory_space<vmem>>, %arg3: memref<1x512xf32, #tpu.memory_space<vmem>>, %arg4: memref<512x136xbf16, #tpu.memory_space<vmem>>, %arg5: memref<1x136xf32, #tpu.memory_space<vmem>>, %arg6: memref<8x136xf32, #tpu.memory_space<vmem>>) attributes {dimension_semantics = [#tpu.dimension_semantics<parallel>], iteration_bounds = array<i64: 2>, scalar_prefetch = 0 : i64, scratch_operands = 0 : i64, tpu.core_type = #tpu.core_type<tc>, window_params = [{transform_indices = @transform_0, window_bounds = array<i64: 8, 32>}, {pipeline_mode = #tpu.pipeline_mode<synchronous>, transform_indices = @transform_1, window_bounds = array<i64: 32, 512>}, {pipeline_mode = #tpu.pipeline_mode<synchronous>, transform_indices = @transform_2, window_bounds = array<i64: 1, 512>}, {pipeline_mode = #tpu.pipeline_mode<synchronous>, transform_indices = @transform_3, window_bounds = array<i64: 512, 136>}, {pipeline_mode = #tpu.pipeline_mode<synchronous>, transform_indices = @transform_4, window_bounds = array<i64: 1, 136>}, {transform_indices = @transform_5, window_bounds = array<i64: 8, 136>}]} {
    %c0 = arith.constant 0 : index
    %c0_0 = arith.constant 0 : index
    %0 = vector.load %arg1[%c0, %c0_0] : memref<8x32xf32, #tpu.memory_space<vmem>>, vector<8x32xf32>
    %1 = arith.truncf %0 : vector<8x32xf32> to vector<8x32xbf16>
    %c0_1 = arith.constant 0 : index
    %c0_2 = arith.constant 0 : index
    %2 = vector.load %arg2[%c0_1, %c0_2] : memref<32x512xbf16, #tpu.memory_space<vmem>>, vector<32x512xbf16>
    %cst = arith.constant dense<0.000000e+00> : vector<8x512xf32>
    %3 = tpu.matmul %1, %2, %cst {dimension_numbers = #tpu.dot_dimension_numbers<[1], [0], [0], [1], [0, 0, 1, 1], [], []>} : vector<8x32xbf16>, vector<32x512xbf16>, vector<8x512xf32> -> vector<8x512xf32>
    %c0_3 = arith.constant 0 : index
    %c0_4 = arith.constant 0 : index
    %4 = vector.load %arg3[%c0_3, %c0_4] : memref<1x512xf32, #tpu.memory_space<vmem>>, vector<1x512xf32>
    %5 = vector.broadcast %4 : vector<1x512xf32> to vector<8x512xf32>
    %6 = arith.addf %3, %5 : vector<8x512xf32>
    %cst_5 = arith.constant 0.000000e+00 : f32
    %7 = vector.broadcast %cst_5 : f32 to vector<8x512xf32>
    %8 = arith.maximumf %6, %7 : vector<8x512xf32>
    %9 = arith.truncf %8 : vector<8x512xf32> to vector<8x512xbf16>
    %c0_6 = arith.constant 0 : index
    %c0_7 = arith.constant 0 : index
    %10 = vector.load %arg4[%c0_6, %c0_7] : memref<512x136xbf16, #tpu.memory_space<vmem>>, vector<512x136xbf16>
    %cst_8 = arith.constant dense<0.000000e+00> : vector<8x136xf32>
    %11 = tpu.matmul %9, %10, %cst_8 {dimension_numbers = #tpu.dot_dimension_numbers<[1], [0], [0], [1], [0, 0, 1, 1], [], []>} : vector<8x512xbf16>, vector<512x136xbf16>, vector<8x136xf32> -> vector<8x136xf32>
    %c0_9 = arith.constant 0 : index
    %c0_10 = arith.constant 0 : index
    %12 = vector.load %arg5[%c0_9, %c0_10] : memref<1x136xf32, #tpu.memory_space<vmem>>, vector<1x136xf32>
    %13 = vector.broadcast %12 : vector<1x136xf32> to vector<8x136xf32>
    %14 = arith.addf %11, %13 : vector<8x136xf32>
    %c0_11 = arith.constant 0 : index
    %c0_12 = arith.constant 0 : index
    %15 = vector.load %arg6[%c0_11, %c0_12] : memref<8x136xf32, #tpu.memory_space<vmem>>, vector<8x136xf32>
    tpu.vector_store %arg6[%c0_11, %c0_12], %14 {strides = array<i32>} : memref<8x136xf32, #tpu.memory_space<vmem>>, vector<8x136xf32>,
    return
  }
  func.func @transform_0(%arg0: i32) -> (i32, i32) {
    %c0_i32 = arith.constant 0 : i32
    %c0_i32_0 = arith.constant 0 : i32
    return %arg0, %c0_i32 : i32, i32
  }
  func.func @transform_1(%arg0: i32) -> (i32, i32) {
    %c0_i32 = arith.constant 0 : i32
    %c0_i32_0 = arith.constant 0 : i32
    %c0_i32_1 = arith.constant 0 : i32
    return %c0_i32, %c0_i32_0 : i32, i32
  }
  func.func @transform_2(%arg0: i32) -> (i32, i32) {
    %c0_i32 = arith.constant 0 : i32
    %c0_i32_0 = arith.constant 0 : i32
    %c0_i32_1 = arith.constant 0 : i32
    return %c0_i32, %c0_i32_0 : i32, i32
  }
  func.func @transform_3(%arg0: i32) -> (i32, i32) {
    %c0_i32 = arith.constant 0 : i32
    %c0_i32_0 = arith.constant 0 : i32
    %c0_i32_1 = arith.constant 0 : i32
    return %c0_i32, %c0_i32_0 : i32, i32
  }
  func.func @transform_4(%arg0: i32) -> (i32, i32) {
    %c0_i32 = arith.constant 0 : i32
    %c0_i32_0 = arith.constant 0 : i32
    %c0_i32_1 = arith.constant 0 : i32
    return %c0_i32, %c0_i32_0 : i32, i32
  }
  func.func @transform_5(%arg0: i32) -> (i32, i32) {
    %c0_i32 = arith.constant 0 : i32
    %c0_i32_0 = arith.constant 0 : i32
    return %arg0, %c0_i32 : i32, i32
  }
}

</mosaic_0001>

<llo_original>
// kernel: generator_w1b_2layer.1
$region0: #{generator_w1b_2layer.1}
  #allocation0 [shape = 'u32[]', space=smem, size = 0x4, offset = 0x4, fixed_abs, tag = 'smem constant byte address 0x4 - core index']
  #allocation1 [shape = 'u32[144,128]{1,0:T(1,128)}', space=vmem, size = 0x12000, scoped, tag = 'internal scratch']
  %s0 = inlined_call_operand.vmem [shape: f32[16,32], index: 0, kind: input, shape index: {}]
  %s1 = inlined_call_operand.vmem [shape: bf16[32,512], index: 1, kind: input, shape index: {}]
  %s2 = inlined_call_operand.vmem [shape: f32[1,512], index: 2, kind: input, shape index: {}]
  %s3 = inlined_call_operand.vmem [shape: bf16[512,136], index: 3, kind: input, shape index: {}]
  %s4 = inlined_call_operand.vmem [shape: f32[1,136], index: 4, kind: input, shape index: {}]
  %s5 = inlined_call_operand.vmem [shape: f32[16,136], index: 5, kind: output, shape index: {}]
  %s6 = sld [smem:[#allocation0]]
  $region53: #{generator_w1b_2layer.1} parent=0
    _
  %s8 = ssub.s32 1, %s6
  %s9 = scalar_select 0, %s8, %s6
  loop: start=0, step=1, limit=4
  $region2: #{generator_w1b_2layer.1} parent=0 // loop_pre_header
    _
  $region3: #{generator_w1b_2layer.1} parent=0 // loop_header
    %s11 = sphi 0, %s15
    %p12 = scmp.ge.s32.totalorder %s11, 4
    %s21 = sphi 0, %s23
    %s24 = sphi 0, %s21
    %s25 = sphi 0, %s24
    %s41 = sphi 0, %s25
    %s45 = sphi 0, %s45
    %s47 = sphi 0, %s45
    %s48 = sphi 0, %s47
    %s62 = sphi 0, %s48
    %s66 = sphi 0, %s66
    %s68 = sphi 0, %s66
    %s69 = sphi 0, %s68
    %s83 = sphi 0, %s69
    %s87 = sphi 0, %s87
    %s89 = sphi 0, %s87
    %s90 = sphi 0, %s89
    %s104 = sphi 0, %s90
    %s108 = sphi 0, %s108
    %s110 = sphi 0, %s108
    %s111 = sphi 0, %s110
    %s125 = sphi 0, %s111
    %s131 = sphi 0, %s133
    %s134 = sphi 0, %s131
    %s135 = sphi 0, %s134
    %s151 = sphi 0, %s135
  $region4: #{generator_w1b_2layer.1} parent=0 // loop_header_branch
    %14 = sbr.rel (%p12) target = $region8
  $region5: #{generator_w1b_2layer.1} parent=0 // loop_body
    %s16 = ssub.s32 %s11, 1
    %s17 = ssub.s32 %s11, 2
    %s18 = sadd.s32 %s11, 1
    %s19 = ssub.s32 %s11, %s18
    %p20 = scmp.eq.s32.totalorder %s19, 0
    %s22 = sadd.s32 %s21, 1
    %s23 = scalar_select %p20, %s21, %s22
    %p26 = pneg %p20
    %p27 = scmp.eq.s32.totalorder %s11, 1
    %p28 = por %p26, %p27
    %p29 = scmp.ne.s32.totalorder %s21, %s24
    %p30 = scmp.eq.s32.totalorder %s11, 0
    %p31 = por %p29, %p30
    %p32 = scmp.ne.s32.totalorder %s21, %s24
    %p33 = scmp.eq.s32.totalorder %s16, 1
    %p34 = por %p32, %p33
    %p35 = scmp.ne.s32.totalorder %s24, %s25
    %p36 = scmp.eq.s32.totalorder %s16, 0
    %p37 = por %p35, %p36
    %p38 = scmp.ne.s32.totalorder %s24, %s25
    %p39 = scmp.eq.s32.totalorder %s17, 1
    %p40 = por %p38, %p39
    %p42 = scmp.ne.s32.totalorder %s25, %s41
    %p43 = scmp.eq.s32.totalorder %s17, 0
    %p44 = por %p42, %p43
    %s46 = sadd.s32 %s45, 1
    %p49 = scmp.eq.s32.totalorder %s11, 1
    %p50 = scmp.ne.s32.totalorder %s45, %s47
    %p51 = scmp.eq.s32.totalorder %s11, 0
    %p52 = por %p50, %p51
    %p53 = scmp.ne.s32.totalorder %s45, %s47
    %p54 = scmp.eq.s32.totalorder %s16, 1
    %p55 = por %p53, %p54
    %p56 = scmp.ne.s32.totalorder %s47, %s48
    %p57 = scmp.eq.s32.totalorder %s16, 0
    %p58 = por %p56, %p57
    %p59 = scmp.ne.s32.totalorder %s47, %s48
    %p60 = scmp.eq.s32.totalorder %s17, 1
    %p61 = por %p59, %p60
    %p63 = scmp.ne.s32.totalorder %s48, %s62
    %p64 = scmp.eq.s32.totalorder %s17, 0
    %p65 = por %p63, %p64
    %s67 = sadd.s32 %s66, 1
    %p70 = scmp.eq.s32.totalorder %s11, 1
    %p71 = scmp.ne.s32.totalorder %s66, %s68
    %p72 = scmp.eq.s32.totalorder %s11, 0
    %p73 = por %p71, %p72
    %p74 = scmp.ne.s32.totalorder %s66, %s68
    %p75 = scmp.eq.s32.totalorder %s16, 1
    %p76 = por %p74, %p75
    %p77 = scmp.ne.s32.totalorder %s68, %s69
    %p78 = scmp.eq.s32.totalorder %s16, 0
    %p79 = por %p77, %p78
    %p80 = scmp.ne.s32.totalorder %s68, %s69
    %p81 = scmp.eq.s32.totalorder %s17, 1
    %p82 = por %p80, %p81
    %p84 = scmp.ne.s32.totalorder %s69, %s83
    %p85 = scmp.eq.s32.totalorder %s17, 0
    %p86 = por %p84, %p85
    %s88 = sadd.s32 %s87, 1
    %p91 = scmp.eq.s32.totalorder %s11, 1
    %p92 = scmp.ne.s32.totalorder %s87, %s89
    %p93 = scmp.eq.s32.totalorder %s11, 0
    %p94 = por %p92, %p93
    %p95 = scmp.ne.s32.totalorder %s87, %s89
    %p96 = scmp.eq.s32.totalorder %s16, 1
    %p97 = por %p95, %p96
    %p98 = scmp.ne.s32.totalorder %s89, %s90
    %p99 = scmp.eq.s32.totalorder %s16, 0
    %p100 = por %p98, %p99
    %p101 = scmp.ne.s32.totalorder %s89, %s90
    %p102 = scmp.eq.s32.totalorder %s17, 1
    %p103 = por %p101, %p102
    %p105 = scmp.ne.s32.totalorder %s90, %s104
    %p106 = scmp.eq.s32.totalorder %s17, 0
    %p107 = por %p105, %p106
    %s109 = sadd.s32 %s108, 1
    %p112 = scmp.eq.s32.totalorder %s11, 1
    %p113 = scmp.ne.s32.totalorder %s108, %s110
    %p114 = scmp.eq.s32.totalorder %s11, 0
    %p115 = por %p113, %p114
    %p116 = scmp.ne.s32.totalorder %s108, %s110
    %p117 = scmp.eq.s32.totalorder %s16, 1
    %p118 = por %p116, %p117
    %p119 = scmp.ne.s32.totalorder %s110, %s111
    %p120 = scmp.eq.s32.totalorder %s16, 0
    %p121 = por %p119, %p120
    %p122 = scmp.ne.s32.totalorder %s110, %s111
    %p123 = scmp.eq.s32.totalorder %s17, 1
    %p124 = por %p122, %p123
    %p126 = scmp.ne.s32.totalorder %s111, %s125
    %p127 = scmp.eq.s32.totalorder %s17, 0
    %p128 = por %p126, %p127
    %s129 = ssub.s32 %s11, %s18
    %p130 = scmp.eq.s32.totalorder %s129, 0
    %s132 = sadd.s32 %s131, 1
    %s133 = scalar_select %p130, %s131, %s132
    %p136 = pneg %p130
    %p137 = scmp.eq.s32.totalorder %s11, 1
    %p138 = por %p136, %p137
    %p139 = scmp.ne.s32.totalorder %s131, %s134
    %p140 = scmp.eq.s32.totalorder %s11, 0
    %p141 = por %p139, %p140
    %p142 = scmp.ne.s32.totalorder %s131, %s134
    %p143 = scmp.eq.s32.totalorder %s16, 1
    %p144 = por %p142, %p143
    %p145 = scmp.ne.s32.totalorder %s134, %s135
    %p146 = scmp.eq.s32.totalorder %s16, 0
    %p147 = por %p145, %p146
    %p148 = scmp.ne.s32.totalorder %s134, %s135
    %p149 = scmp.eq.s32.totalorder %s17, 1
    %p150 = por %p148, %p149
    %p152 = scmp.ne.s32.totalorder %s135, %s151
    %p153 = scmp.eq.s32.totalorder %s17, 0
    %p154 = por %p152, %p153
    %p155 = scmp.le.s32.totalorder 1, %s11
    %p156 = scmp.lt.s32.totalorder %s11, 3
    %p157 = pnand %p155, %p156
    %p158 = pneg %p157
    // Predicated region
    $region9: #{generator_w1b_2layer.1} parent=5 // pred_check
      _
    $region10: #{generator_w1b_2layer.1} parent=5 // pred_check_branch
      %160 = sbr.rel (%p157) target = $region12
    $region11: #{generator_w1b_2layer.1} parent=5 // pred_region
      %s161 = ssub.s32 %s11, 1
      // Predicated region
      $region13: #{generator_w1b_2layer.1} parent=11 // pred_check
        %p162 = pneg %p58
      $region14: #{generator_w1b_2layer.1} parent=11 // pred_check_branch
        %164 = sbr.rel (%p162) target = $region16
      $region15: #{generator_w1b_2layer.1} parent=11 // pred_region
        _
      $region16: #{generator_w1b_2layer.1} parent=11 // pred_fallthru
        _
      // Predicated region
      $region17: #{generator_w1b_2layer.1} parent=11 // pred_check
        %p165 = pneg %p79
      $region18: #{generator_w1b_2layer.1} parent=11 // pred_check_branch
        %167 = sbr.rel (%p165) target = $region20
      $region19: #{generator_w1b_2layer.1} parent=11 // pred_region
        _
      $region20: #{generator_w1b_2layer.1} parent=11 // pred_fallthru
        _
      // Predicated region
      $region21: #{generator_w1b_2layer.1} parent=11 // pred_check
        %p168 = pneg %p100
      $region22: #{generator_w1b_2layer.1} parent=11 // pred_check_branch
        %170 = sbr.rel (%p168) target = $region24
      $region23: #{generator_w1b_2layer.1} parent=11 // pred_region
        _
      $region24: #{generator_w1b_2layer.1} parent=11 // pred_fallthru
        _
      // Predicated region
      $region25: #{generator_w1b_2layer.1} parent=11 // pred_check
        %p171 = pneg %p121
      $region26: #{generator_w1b_2layer.1} parent=11 // pred_check_branch
        %173 = sbr.rel (%p171) target = $region28
      $region27: #{generator_w1b_2layer.1} parent=11 // pred_region
        _
      $region28: #{generator_w1b_2layer.1} parent=11 // pred_fallthru
        _
    $region12: #{generator_w1b_2layer.1} parent=5 // pred_fallthru
      _
    %p174 = scmp.lt.s32.totalorder %s11, 2
    // Predicated region
    $region29: #{generator_w1b_2layer.1} parent=5 // pred_check
      %p175 = pneg %p174
    $region30: #{generator_w1b_2layer.1} parent=5 // pred_check_branch
      %177 = sbr.rel (%p175) target = $region32
    $region31: #{generator_w1b_2layer.1} parent=5 // pred_region
      // Predicated region
      $region33: #{generator_w1b_2layer.1} parent=31 // pred_check
        %p178 = pneg %p31
      $region34: #{generator_w1b_2layer.1} parent=31 // pred_check_branch
        %180 = sbr.rel (%p178) target = $region36
      $region35: #{generator_w1b_2layer.1} parent=31 // pred_region
        %p181 = scmp.lt.s32.totalorder %s11, 1
        %s182 = scalar_select %p181, %s11, 1
        %s183 = smul.addr %s182, 8
        %s184 = scalar_lea.vmem %s0, %s183
      $region36: #{generator_w1b_2layer.1} parent=31 // pred_fallthru
        _
    $region32: #{generator_w1b_2layer.1} parent=5 // pred_fallthru
      _
    %p185 = scmp.le.s32.totalorder 1, %s11
    %p186 = scmp.lt.s32.totalorder %s11, 3
    %p187 = pnand %p185, %p186
    %p188 = pneg %p187
    // Predicated region
    $region37: #{generator_w1b_2layer.1} parent=5 // pred_check
      _
    $region38: #{generator_w1b_2layer.1} parent=5 // pred_check_branch
      %190 = sbr.rel (%p187) target = $region40
    $region39: #{generator_w1b_2layer.1} parent=5 // pred_region
      %s191 = ssub.s32 %s11, 1
      %p192 = scmp.lt.s32.totalorder %s16, 1
      %s193 = scalar_select %p192, %s16, 1
      %s194 = smul.addr %s193, 8
      %s195 = scalar_lea.vmem %s0, %s194
      %p196 = pneg %p37
      %p197 = pneg %p34
      %p198 = pneg %p58
      %p199 = pneg %p55
      %p200 = pneg %p79
      %p201 = pneg %p76
      %p202 = pneg %p100
      %p203 = pneg %p97
      %p204 = pneg %p121
      %p205 = pneg %p118
      %p206 = pneg %p147
      %p207 = pneg %p144
      %p208 = scmp.lt.s32.totalorder %s16, 1
      %s209 = scalar_select %p208, %s16, 1
      %s210 = smul.addr %s209, 2
      %s211 = smul.addr %s210, 8
      %s212 = scalar_lea.vmem %s5, %s211
      %p213 = scmp.lt.s32.totalorder %s16, 1
      %s214 = scalar_select %p213, %s16, 1
      %s215 = smul.addr %s214, 8
      %s216 = scalar_lea.vmem %s0, %s215
      %p217 = scmp.lt.s32.totalorder %s16, 1
      %s218 = scalar_select %p217, %s16, 1
      %s219 = smul.addr %s218, 2
      %s220 = smul.addr %s219, 8
      %s221 = scalar_lea.vmem %s5, %s220
      %v223 = vld [vmem:[%s216] sm:$0xff]
      %v224 = vpack.c.bf16 %v223, %v223
      %v225 = vld [vmem:[%s1] sm:$0xff]
      %v226 = vld [vmem:[%s1 + $0x8] sm:$0xff]
      %v227 = vld [vmem:[%s1 + $0x10] sm:$0xff]
      %v228 = vld [vmem:[%s1 + $0x18] sm:$0xff]
      %v229 = vld [vmem:[%s1 + $0x20] sm:$0xff]
      %v230 = vld [vmem:[%s1 + $0x28] sm:$0xff]
      %v231 = vld [vmem:[%s1 + $0x30] sm:$0xff]
      %v232 = vld [vmem:[%s1 + $0x38] sm:$0xff]
      %v233 = vld [vmem:[%s2] sm:$0xf]
      %v235 = vlaneseq
      %v236 = vshrl.u32 %v235, 7
      %v237 = vsub.s32 0, %v236
      %v238 = vrot.slane %v233, %v237
      %v239 = vlaneseq
      %v240 = vshrl.u32 %v239, 7
      %v241 = vsub.s32 1, %v240
      %v242 = vrot.slane %v233, %v241
      %v243 = vlaneseq
      %v244 = vshrl.u32 %v243, 7
      %v245 = vsub.s32 2, %v244
      %v246 = vrot.slane %v233, %v245
      %v247 = vlaneseq
      %v248 = vshrl.u32 %v247, 7
      %v249 = vsub.s32 3, %v248
      %v250 = vrot.slane %v233, %v249
      %v263 = vunpack.c.l.b16 %v225
      %v264 = vunpack.c.h.b16 %v225
      %v265 = vunpack.c.l.b16 %v226
      %v266 = vunpack.c.h.b16 %v226
      %v267 = vunpack.c.l.b16 %v227
      %v268 = vunpack.c.h.b16 %v227
      %v269 = vunpack.c.l.b16 %v228
      %v270 = vunpack.c.h.b16 %v228
      %v271 = vunpack.c.l.b16 %v229
      %v272 = vunpack.c.h.b16 %v229
      %v273 = vunpack.c.l.b16 %v230
      %v274 = vunpack.c.h.b16 %v230
      %v275 = vunpack.c.l.b16 %v231
      %v276 = vunpack.c.h.b16 %v231
      %v277 = vunpack.c.l.b16 %v232
      %v278 = vunpack.c.h.b16 %v232
      %v279 = vpack.c.b16 %v267, %v263
      %v280 = vpack.c.b16 %v268, %v264
      %v281 = vpack.c.b16 %v269, %v265
      %v282 = vpack.c.b16 %v270, %v266
      %v283 = vpack.c.b16 %v275, %v271
      %v284 = vpack.c.b16 %v276, %v272
      %v285 = vpack.c.b16 %v277, %v273
      %v286 = vpack.c.b16 %v278, %v274
      %vm295 = vcmask 261120
      %v297 = vsel %vm295, %v224, 0
      %299 = vmatprep.subr.bf16.mxu0 %v280
      %300 = vmatpush1.bf16.msra.mxu0 %v279
      %301 = vmatprep.subr.bf16.mxu0 %v284
      %302 = vmatpush1.bf16.msra.mxu0 %v283
      %303 = vmatprep.subr.bf16.mxu0 0
      %304 = vmatpush1.bf16.msra.mxu0 0
      %305 = vmatprep.subr.bf16.mxu0 0
      %306 = vmatpush1.bf16.msra.mxu0 0
      %307 = vmatprep.subr.bf16.mxu0 0
      %308 = vmatpush1.bf16.msra.mxu0 0
      %309 = vmatprep.subr.bf16.mxu0 0
      %310 = vmatpush1.bf16.msra.mxu0 0
      %311 = vmatprep.subr.bf16.mxu0 0
      %312 = vmatpush1.bf16.msra.mxu0 0
      %313 = vmatprep.subr.bf16.mxu0 0
      %314 = vmatpush1.bf16.msra.mxu0 0
      %315 = vmatprep.subr.bf16.mxu0 0
      %316 = vmatpush1.bf16.msra.mxu0 0
      %317 = vmatprep.subr.bf16.mxu0 0
      %318 = vmatpush1.bf16.msra.mxu0 0
      %319 = vmatprep.subr.bf16.mxu0 0
      %320 = vmatpush1.bf16.msra.mxu0 0
      %321 = vmatprep.subr.bf16.mxu0 0
      %322 = vmatpush1.bf16.msra.mxu0 0
      %323 = vmatprep.subr.bf16.mxu0 0
      %324 = vmatpush1.bf16.msra.mxu0 0
      %325 = vmatprep.subr.bf16.mxu0 0
      %326 = vmatpush1.bf16.msra.mxu0 0
      %327 = vmatprep.subr.bf16.mxu0 0
      %328 = vmatpush1.bf16.msra.mxu0 0
      %329 = vmatprep.subr.bf16.mxu0 0
      %330 = vmatpush1.bf16.msra.mxu0 0
      %331 = vmatprep.mubr.bf16.mxu0 0
      %332 = vmatmul.mubr.bf16.gmra.mrb[0].mxu0 %v297
      %v333 = vpop.f32.mrb[0].mxu0
      %v334 = vadd.f32 %v238, %v333
      %v335 = vpop.f32.mrb[0].mxu0
      %v336 = vadd.f32 %v242, %v335
      %v337 = vpop.f32.mrb[0].mxu0
      %v338 = vpop.f32.mrb[0].mxu0
      %339 = vdwg.mxu0
      %340 = vmatprep.subr.bf16.mxu0 %v282
      %341 = vmatpush1.bf16.msra.mxu0 %v281
      %342 = vmatprep.subr.bf16.mxu0 %v286
      %343 = vmatpush1.bf16.msra.mxu0 %v285
      %344 = vmatprep.subr.bf16.mxu0 0
      %345 = vmatpush1.bf16.msra.mxu0 0
      %346 = vmatprep.subr.bf16.mxu0 0
      %347 = vmatpush1.bf16.msra.mxu0 0
      %348 = vmatprep.subr.bf16.mxu0 0
      %349 = vmatpush1.bf16.msra.mxu0 0
      %350 = vmatprep.subr.bf16.mxu0 0
      %351 = vmatpush1.bf16.msra.mxu0 0
      %352 = vmatprep.subr.bf16.mxu0 0
      %353 = vmatpush1.bf16.msra.mxu0 0
      %354 = vmatprep.subr.bf16.mxu0 0
      %355 = vmatpush1.bf16.msra.mxu0 0
      %356 = vmatprep.subr.bf16.mxu0 0
      %357 = vmatpush1.bf16.msra.mxu0 0
      %358 = vmatprep.subr.bf16.mxu0 0
      %359 = vmatpush1.bf16.msra.mxu0 0
      %360 = vmatprep.subr.bf16.mxu0 0
      %361 = vmatpush1.bf16.msra.mxu0 0
      %362 = vmatprep.subr.bf16.mxu0 0
      %363 = vmatpush1.bf16.msra.mxu0 0
      %364 = vmatprep.subr.bf16.mxu0 0
      %365 = vmatpush1.bf16.msra.mxu0 0
      %366 = vmatprep.subr.bf16.mxu0 0
      %367 = vmatpush1.bf16.msra.mxu0 0
      %368 = vmatprep.subr.bf16.mxu0 0
      %369 = vmatpush1.bf16.msra.mxu0 0
      %370 = vmatprep.subr.bf16.mxu0 0
      %371 = vmatpush1.bf16.msra.mxu0 0
      %372 = vmatprep.mubr.bf16.mxu0 0
      %373 = vmatmul.mubr.bf16.gmra.mrb[0].mxu0 %v297
      %v374 = vpop.f32.mrb[0].mxu0
      %v375 = vadd.f32 %v246, %v374
      %v376 = vpop.f32.mrb[0].mxu0
      %v377 = vadd.f32 %v250, %v376
      %v378 = vpop.f32.mrb[0].mxu0
      %v379 = vpop.f32.mrb[0].mxu0
      %380 = vdwg.mxu0
      %v381 = vmax.f32 %v334, 0.0
      %v382 = vmax.f32 %v336, 0.0
      %v383 = vmax.f32 %v375, 0.0
      %v384 = vmax.f32 %v377, 0.0
      %v385 = vpack.c.bf16 %v381, %v381
      %v386 = vpack.c.bf16 %v382, %v382
      %v387 = vpack.c.bf16 %v383, %v383
      %v388 = vpack.c.bf16 %v384, %v384
      %v389 = vld [vmem:[%s3] sm:$0xff]
      %v390 = vld [vmem:[%s3 + $0x8] sm:$0xff]
      %v391 = vld [vmem:[%s3 + $0x10] sm:$0xff]
      %v392 = vld [vmem:[%s3 + $0x18] sm:$0xff]
      %v393 = vld [vmem:[%s3 + $0x20] sm:$0xff]
      %v394 = vld [vmem:[%s3 + $0x28] sm:$0xff]
      %v395 = vld [vmem:[%s3 + $0x30] sm:$0xff]
      %v396 = vld [vmem:[%s3 + $0x38] sm:$0xff]
      %v397 = vld [vmem:[%s3 + $0x40] sm:$0xff]
      %v398 = vld [vmem:[%s3 + $0x48] sm:$0xff]
      %v399 = vld [vmem:[%s3 + $0x50] sm:$0xff]
      %v400 = vld [vmem:[%s3 + $0x58] sm:$0xff]
      %v401 = vld [vmem:[%s3 + $0x60] sm:$0xff]
      %v402 = vld [vmem:[%s3 + $0x68] sm:$0xff]
      %v403 = vld [vmem:[%s3 + $0x70] sm:$0xff]
      %v404 = vld [vmem:[%s3 + $0x78] sm:$0xff]
      %v405 = vld [vmem:[%s3 + $0x80] sm:$0xff]
      %v406 = vld [vmem:[%s3 + $0x88] sm:$0xff]
      %v407 = vld [vmem:[%s3 + $0x90] sm:$0xff]
      %v408 = vld [vmem:[%s3 + $0x98] sm:$0xff]
      %v409 = vld [vmem:[%s3 + $0xa0] sm:$0xff]
      %v410 = vld [vmem:[%s3 + $0xa8] sm:$0xff]
      %v411 = vld [vmem:[%s3 + $0xb0] sm:$0xff]
      %v412 = vld [vmem:[%s3 + $0xb8] sm:$0xff]
      %v413 = vld [vmem:[%s3 + $0xc0] sm:$0xff]
      %v414 = vld [vmem:[%s3 + $0xc8] sm:$0xff]
      %v415 = vld [vmem:[%s3 + $0xd0] sm:$0xff]
      %v416 = vld [vmem:[%s3 + $0xd8] sm:$0xff]
      %v417 = vld [vmem:[%s3 + $0xe0] sm:$0xff]
      %v418 = vld [vmem:[%s3 + $0xe8] sm:$0xff]
      %v419 = vld [vmem:[%s3 + $0xf0] sm:$0xff]
      %v420 = vld [vmem:[%s3 + $0xf8] sm:$0xff]
      %v421 = vld [vmem:[%s3 + $0x100] sm:$0xff]
      %v422 = vld [vmem:[%s3 + $0x108] sm:$0xff]
      %v423 = vld [vmem:[%s3 + $0x110] sm:$0xff]
      %v424 = vld [vmem:[%s3 + $0x118] sm:$0xff]
      %v425 = vld [vmem:[%s3 + $0x120] sm:$0xff]
      %v426 = vld [vmem:[%s3 + $0x128] sm:$0xff]
      %v427 = vld [vmem:[%s3 + $0x130] sm:$0xff]
      %v428 = vld [vmem:[%s3 + $0x138] sm:$0xff]
      %v429 = vld [vmem:[%s3 + $0x140] sm:$0xff]
      %v430 = vld [vmem:[%s3 + $0x148] sm:$0xff]
      %v431 = vld [vmem:[%s3 + $0x150] sm:$0xff]
      %v432 = vld [vmem:[%s3 + $0x158] sm:$0xff]
      %v433 = vld [vmem:[%s3 + $0x160] sm:$0xff]
      %v434 = vld [vmem:[%s3 + $0x168] sm:$0xff]
      %v435 = vld [vmem:[%s3 + $0x170] sm:$0xff]
      %v436 = vld [vmem:[%s3 + $0x178] sm:$0xff]
      %v437 = vld [vmem:[%s3 + $0x180] sm:$0xff]
      %v438 = vld [vmem:[%s3 + $0x188] sm:$0xff]
      %v439 = vld [vmem:[%s3 + $0x190] sm:$0xff]
      %v440 = vld [vmem:[%s3 + $0x198] sm:$0xff]
      %v441 = vld [vmem:[%s3 + $0x1a0] sm:$0xff]
      %v442 = vld [vmem:[%s3 + $0x1a8] sm:$0xff]
      %v443 = vld [vmem:[%s3 + $0x1b0] sm:$0xff]
      %v444 = vld [vmem:[%s3 + $0x1b8] sm:$0xff]
      %v445 = vld [vmem:[%s3 + $0x1c0] sm:$0xff]
      %v446 = vld [vmem:[%s3 + $0x1c8] sm:$0xff]
      %v447 = vld [vmem:[%s3 + $0x1d0] sm:$0xff]
      %v448 = vld [vmem:[%s3 + $0x1d8] sm:$0xff]
      %v449 = vld [vmem:[%s3 + $0x1e0] sm:$0xff]
      %v450 = vld [vmem:[%s3 + $0x1e8] sm:$0xff]
      %v451 = vld [vmem:[%s3 + $0x1f0] sm:$0xff]
      %v452 = vld [vmem:[%s3 + $0x1f8] sm:$0xff]
      %v453 = vld [vmem:[%s4] sm:$0x3]
      %v455 = vlaneseq
      %v456 = vshrl.u32 %v455, 7
      %v457 = vsub.s32 0, %v456
      %v458 = vrot.slane %v453, %v457
      %v459 = vlaneseq
      %v460 = vshrl.u32 %v459, 7
      %v461 = vsub.s32 1, %v460
      %v462 = vrot.slane %v453, %v461
      %v529 = vunpack.c.l.b16 %v389
      %v530 = vunpack.c.h.b16 %v389
      %v531 = vunpack.c.l.b16 %v390
      %v532 = vunpack.c.h.b16 %v390
      %v533 = vunpack.c.l.b16 %v391
      %v534 = vunpack.c.h.b16 %v391
      %v535 = vunpack.c.l.b16 %v392
      %v536 = vunpack.c.h.b16 %v392
      %v537 = vunpack.c.l.b16 %v393
      %v538 = vunpack.c.h.b16 %v393
      %v539 = vunpack.c.l.b16 %v394
      %v540 = vunpack.c.h.b16 %v394
      %v541 = vunpack.c.l.b16 %v395
      %v542 = vunpack.c.h.b16 %v395
      %v543 = vunpack.c.l.b16 %v396
      %v544 = vunpack.c.h.b16 %v396
      %v545 = vunpack.c.l.b16 %v397
      %v546 = vunpack.c.h.b16 %v397
      %v547 = vunpack.c.l.b16 %v398
      %v548 = vunpack.c.h.b16 %v398
      %v549 = vunpack.c.l.b16 %v399
      %v550 = vunpack.c.h.b16 %v399
      %v551 = vunpack.c.l.b16 %v400
      %v552 = vunpack.c.h.b16 %v400
      %v553 = vunpack.c.l.b16 %v401
      %v554 = vunpack.c.h.b16 %v401
      %v555 = vunpack.c.l.b16 %v402
      %v556 = vunpack.c.h.b16 %v402
      %v557 = vunpack.c.l.b16 %v403
      %v558 = vunpack.c.h.b16 %v403
      %v559 = vunpack.c.l.b16 %v404
      %v560 = vunpack.c.h.b16 %v404
      %v561 = vunpack.c.l.b16 %v405
      %v562 = vunpack.c.h.b16 %v405
      %v563 = vunpack.c.l.b16 %v406
      %v564 = vunpack.c.h.b16 %v406
      %v565 = vunpack.c.l.b16 %v407
      %v566 = vunpack.c.h.b16 %v407
      %v567 = vunpack.c.l.b16 %v408
      %v568 = vunpack.c.h.b16 %v408
      %v569 = vunpack.c.l.b16 %v409
      %v570 = vunpack.c.h.b16 %v409
      %v571 = vunpack.c.l.b16 %v410
      %v572 = vunpack.c.h.b16 %v410
      %v573 = vunpack.c.l.b16 %v411
      %v574 = vunpack.c.h.b16 %v411
      %v575 = vunpack.c.l.b16 %v412
      %v576 = vunpack.c.h.b16 %v412
      %v577 = vunpack.c.l.b16 %v413
      %v578 = vunpack.c.h.b16 %v413
      %v579 = vunpack.c.l.b16 %v414
      %v580 = vunpack.c.h.b16 %v414
      %v581 = vunpack.c.l.b16 %v415
      %v582 = vunpack.c.h.b16 %v415
      %v583 = vunpack.c.l.b16 %v416
      %v584 = vunpack.c.h.b16 %v416
      %v585 = vunpack.c.l.b16 %v417
      %v586 = vunpack.c.h.b16 %v417
      %v587 = vunpack.c.l.b16 %v418
      %v588 = vunpack.c.h.b16 %v418
      %v589 = vunpack.c.l.b16 %v419
      %v590 = vunpack.c.h.b16 %v419
      %v591 = vunpack.c.l.b16 %v420
      %v592 = vunpack.c.h.b16 %v420
      %v593 = vunpack.c.l.b16 %v421
      %v594 = vunpack.c.h.b16 %v421
      %v595 = vunpack.c.l.b16 %v422
      %v596 = vunpack.c.h.b16 %v422
      %v597 = vunpack.c.l.b16 %v423
      %v598 = vunpack.c.h.b16 %v423
      %v599 = vunpack.c.l.b16 %v424
      %v600 = vunpack.c.h.b16 %v424
      %v601 = vunpack.c.l.b16 %v425
      %v602 = vunpack.c.h.b16 %v425
      %v603 = vunpack.c.l.b16 %v426
      %v604 = vunpack.c.h.b16 %v426
      %v605 = vunpack.c.l.b16 %v427
      %v606 = vunpack.c.h.b16 %v427
      %v607 = vunpack.c.l.b16 %v428
      %v608 = vunpack.c.h.b16 %v428
      %v609 = vunpack.c.l.b16 %v429
      %v610 = vunpack.c.h.b16 %v429
      %v611 = vunpack.c.l.b16 %v430
      %v612 = vunpack.c.h.b16 %v430
      %v613 = vunpack.c.l.b16 %v431
      %v614 = vunpack.c.h.b16 %v431
      %v615 = vunpack.c.l.b16 %v432
      %v616 = vunpack.c.h.b16 %v432
      %v617 = vunpack.c.l.b16 %v433
      %v618 = vunpack.c.h.b16 %v433
      %v619 = vunpack.c.l.b16 %v434
      %v620 = vunpack.c.h.b16 %v434
      %v621 = vunpack.c.l.b16 %v435
      %v622 = vunpack.c.h.b16 %v435
      %v623 = vunpack.c.l.b16 %v436
      %v624 = vunpack.c.h.b16 %v436
      %v625 = vunpack.c.l.b16 %v437
      %v626 = vunpack.c.h.b16 %v437
      %v627 = vunpack.c.l.b16 %v438
      %v628 = vunpack.c.h.b16 %v438
      %v629 = vunpack.c.l.b16 %v439
      %v630 = vunpack.c.h.b16 %v439
      %v631 = vunpack.c.l.b16 %v440
      %v632 = vunpack.c.h.b16 %v440
      %v633 = vunpack.c.l.b16 %v441
      %v634 = vunpack.c.h.b16 %v441
      %v635 = vunpack.c.l.b16 %v442
      %v636 = vunpack.c.h.b16 %v442
      %v637 = vunpack.c.l.b16 %v443
      %v638 = vunpack.c.h.b16 %v443
      %v639 = vunpack.c.l.b16 %v444
      %v640 = vunpack.c.h.b16 %v444
      %v641 = vunpack.c.l.b16 %v445
      %v642 = vunpack.c.h.b16 %v445
      %v643 = vunpack.c.l.b16 %v446
      %v644 = vunpack.c.h.b16 %v446
      %v645 = vunpack.c.l.b16 %v447
      %v646 = vunpack.c.h.b16 %v447
      %v647 = vunpack.c.l.b16 %v448
      %v648 = vunpack.c.h.b16 %v448
      %v649 = vunpack.c.l.b16 %v449
      %v650 = vunpack.c.h.b16 %v449
      %v651 = vunpack.c.l.b16 %v450
      %v652 = vunpack.c.h.b16 %v450
      %v653 = vunpack.c.l.b16 %v451
      %v654 = vunpack.c.h.b16 %v451
      %v655 = vunpack.c.l.b16 %v452
      %v656 = vunpack.c.h.b16 %v452
      %v657 = vpack.c.b16 %v531, %v529
      %v658 = vpack.c.b16 %v532, %v530
      %v659 = vpack.c.b16 %v535, %v533
      %v660 = vpack.c.b16 %v536, %v534
      %v661 = vpack.c.b16 %v539, %v537
      %v662 = vpack.c.b16 %v540, %v538
      %v663 = vpack.c.b16 %v543, %v541
      %v664 = vpack.c.b16 %v544, %v542
      %v665 = vpack.c.b16 %v547, %v545
      %v666 = vpack.c.b16 %v548, %v546
      %v667 = vpack.c.b16 %v551, %v549
      %v668 = vpack.c.b16 %v552, %v550
      %v669 = vpack.c.b16 %v555, %v553
      %v670 = vpack.c.b16 %v556, %v554
      %v671 = vpack.c.b16 %v559, %v557
      %v672 = vpack.c.b16 %v560, %v558
      %v673 = vpack.c.b16 %v563, %v561
      %v674 = vpack.c.b16 %v564, %v562
      %v675 = vpack.c.b16 %v567, %v565
      %v676 = vpack.c.b16 %v568, %v566
      %v677 = vpack.c.b16 %v571, %v569
      %v678 = vpack.c.b16 %v572, %v570
      %v679 = vpack.c.b16 %v575, %v573
      %v680 = vpack.c.b16 %v576, %v574
      %v681 = vpack.c.b16 %v579, %v577
      %v682 = vpack.c.b16 %v580, %v578
      %v683 = vpack.c.b16 %v583, %v581
      %v684 = vpack.c.b16 %v584, %v582
      %v685 = vpack.c.b16 %v587, %v585
      %v686 = vpack.c.b16 %v588, %v586
      %v687 = vpack.c.b16 %v591, %v589
      %v688 = vpack.c.b16 %v592, %v590
      %v689 = vpack.c.b16 %v595, %v593
      %v690 = vpack.c.b16 %v596, %v594
      %v691 = vpack.c.b16 %v599, %v597
      %v692 = vpack.c.b16 %v600, %v598
      %v693 = vpack.c.b16 %v603, %v601
      %v694 = vpack.c.b16 %v604, %v602
      %v695 = vpack.c.b16 %v607, %v605
      %v696 = vpack.c.b16 %v608, %v606
      %v697 = vpack.c.b16 %v611, %v609
      %v698 = vpack.c.b16 %v612, %v610
      %v699 = vpack.c.b16 %v615, %v613
      %v700 = vpack.c.b16 %v616, %v614
      %v701 = vpack.c.b16 %v619, %v617
      %v702 = vpack.c.b16 %v620, %v618
      %v703 = vpack.c.b16 %v623, %v621
      %v704 = vpack.c.b16 %v624, %v622
      %v705 = vpack.c.b16 %v627, %v625
      %v706 = vpack.c.b16 %v628, %v626
      %v707 = vpack.c.b16 %v631, %v629
      %v708 = vpack.c.b16 %v632, %v630
      %v709 = vpack.c.b16 %v635, %v633
      %v710 = vpack.c.b16 %v636, %v634
      %v711 = vpack.c.b16 %v639, %v637
      %v712 = vpack.c.b16 %v640, %v638
      %v713 = vpack.c.b16 %v643, %v641
      %v714 = vpack.c.b16 %v644, %v642
      %v715 = vpack.c.b16 %v647, %v645
      %v716 = vpack.c.b16 %v648, %v646
      %v717 = vpack.c.b16 %v651, %v649
      %v718 = vpack.c.b16 %v652, %v650
      %v719 = vpack.c.b16 %v655, %v653
      %v720 = vpack.c.b16 %v656, %v654
      %785 = vmatprep.subr.bf16.mxu0 %v658
      %786 = vmatpush1.bf16.msra.mxu0 %v657
      %787 = vmatprep.subr.bf16.mxu0 %v660
      %788 = vmatpush1.bf16.msra.mxu0 %v659
      %789 = vmatprep.subr.bf16.mxu0 %v662
      %790 = vmatpush1.bf16.msra.mxu0 %v661
      %791 = vmatprep.subr.bf16.mxu0 %v664
      %792 = vmatpush1.bf16.msra.mxu0 %v663
      %793 = vmatprep.subr.bf16.mxu0 %v666
      %794 = vmatpush1.bf16.msra.mxu0 %v665
      %795 = vmatprep.subr.bf16.mxu0 %v668
      %796 = vmatpush1.bf16.msra.mxu0 %v667
      %797 = vmatprep.subr.bf16.mxu0 %v670
      %798 = vmatpush1.bf16.msra.mxu0 %v669
      %799 = vmatprep.subr.bf16.mxu0 %v672
      %800 = vmatpush1.bf16.msra.mxu0 %v671
      %801 = vmatprep.subr.bf16.mxu0 %v674
      %802 = vmatpush1.bf16.msra.mxu0 %v673
      %803 = vmatprep.subr.bf16.mxu0 %v676
      %804 = vmatpush1.bf16.msra.mxu0 %v675
      %805 = vmatprep.subr.bf16.mxu0 %v678
      %806 = vmatpush1.bf16.msra.mxu0 %v677
      %807 = vmatprep.subr.bf16.mxu0 %v680
      %808 = vmatpush1.bf16.msra.mxu0 %v679
      %809 = vmatprep.subr.bf16.mxu0 %v682
      %810 = vmatpush1.bf16.msra.mxu0 %v681
      %811 = vmatprep.subr.bf16.mxu0 %v684
      %812 = vmatpush1.bf16.msra.mxu0 %v683
      %813 = vmatprep.subr.bf16.mxu0 %v686
      %814 = vmatpush1.bf16.msra.mxu0 %v685
      %815 = vmatprep.subr.bf16.mxu0 %v688
      %816 = vmatpush1.bf16.msra.mxu0 %v687
      %817 = vmatprep.mubr.bf16.mxu0 %v386
      %818 = vmatmul.mubr.bf16.gmra.mrb[0].mxu0 %v385
      %v819 = vpop.f32.mrb[0].mxu0
      %v820 = vadd.f32 %v458, %v819
      %v821 = vpop.f32.mrb[0].mxu0
      %v822 = vadd.f32 %v462, %v821
      %v823 = vpop.f32.mrb[0].mxu0
      %v824 = vpop.f32.mrb[0].mxu0
      %825 = vdwg.mxu0
      %826 = vmatprep.subr.bf16.mxu0 %v690
      %827 = vmatpush1.bf16.msra.mxu0 %v689
      %828 = vmatprep.subr.bf16.mxu0 %v692
      %829 = vmatpush1.bf16.msra.mxu0 %v691
      %830 = vmatprep.subr.bf16.mxu0 %v694
      %831 = vmatpush1.bf16.msra.mxu0 %v693
      %832 = vmatprep.subr.bf16.mxu0 %v696
      %833 = vmatpush1.bf16.msra.mxu0 %v695
      %834 = vmatprep.subr.bf16.mxu0 %v698
      %835 = vmatpush1.bf16.msra.mxu0 %v697
      %836 = vmatprep.subr.bf16.mxu0 %v700
      %837 = vmatpush1.bf16.msra.mxu0 %v699
      %838 = vmatprep.subr.bf16.mxu0 %v702
      %839 = vmatpush1.bf16.msra.mxu0 %v701
      %840 = vmatprep.subr.bf16.mxu0 %v704
      %841 = vmatpush1.bf16.msra.mxu0 %v703
      %842 = vmatprep.subr.bf16.mxu0 %v706
      %843 = vmatpush1.bf16.msra.mxu0 %v705
      %844 = vmatprep.subr.bf16.mxu0 %v708
      %845 = vmatpush1.bf16.msra.mxu0 %v707
      %846 = vmatprep.subr.bf16.mxu0 %v710
      %847 = vmatpush1.bf16.msra.mxu0 %v709
      %848 = vmatprep.subr.bf16.mxu0 %v712
      %849 = vmatpush1.bf16.msra.mxu0 %v711
      %850 = vmatprep.subr.bf16.mxu0 %v714
      %851 = vmatpush1.bf16.msra.mxu0 %v713
      %852 = vmatprep.subr.bf16.mxu0 %v716
      %853 = vmatpush1.bf16.msra.mxu0 %v715
      %854 = vmatprep.subr.bf16.mxu0 %v718
      %855 = vmatpush1.bf16.msra.mxu0 %v717
      %856 = vmatprep.subr.bf16.mxu0 %v720
      %857 = vmatpush1.bf16.msra.mxu0 %v719
      %858 = vmatprep.mubr.bf16.mxu0 %v388
      %859 = vmatmul.mubr.bf16.gmra.mrb[0].mxu0 %v387
      %v860 = vpop.f32.mrb[0].mxu0
      %v861 = vadd.f32 %v820, %v860
      %v862 = vpop.f32.mrb[0].mxu0
      %v863 = vadd.f32 %v822, %v862
      %v864 = vpop.f32.mrb[0].mxu0
      %v865 = vpop.f32.mrb[0].mxu0
      %866 = vdwg.mxu0
      %867 = vst [vmem:[%s221] sm:$0xff] %v861
      %vm868 = vcmask 64512
      %869 = vst.msk [vmem:[%s221 + $0x8] sm:$0xff] %vm868, %v863
      %p870 = scmp.lt.s32.totalorder %s16, 1
      %s871 = scalar_select %p870, %s16, 1
      %s872 = smul.addr %s871, 2
      %s873 = smul.addr %s872, 8
      %s874 = scalar_lea.vmem %s5, %s873
      // Predicated region
      $region41: #{generator_w1b_2layer.1} parent=39 // pred_check
        %p875 = pneg %p144
      $region42: #{generator_w1b_2layer.1} parent=39 // pred_check_branch
        %877 = sbr.rel (%p875) target = $region44
      $region43: #{generator_w1b_2layer.1} parent=39 // pred_region
        _
      $region44: #{generator_w1b_2layer.1} parent=39 // pred_fallthru
        _
    $region40: #{generator_w1b_2layer.1} parent=5 // pred_fallthru
      _
    %p878 = scmp.le.s32.totalorder 2, %s11
    // Predicated region
    $region45: #{generator_w1b_2layer.1} parent=5 // pred_check
      %p879 = pneg %p878
    $region46: #{generator_w1b_2layer.1} parent=5 // pred_check_branch
      %881 = sbr.rel (%p879) target = $region48
    $region47: #{generator_w1b_2layer.1} parent=5 // pred_region
      %s882 = ssub.s32 %s11, 2
      // Predicated region
      $region49: #{generator_w1b_2layer.1} parent=47 // pred_check
        %p883 = pneg %p150
      $region50: #{generator_w1b_2layer.1} parent=47 // pred_check_branch
        %885 = sbr.rel (%p883) target = $region52
      $region51: #{generator_w1b_2layer.1} parent=47 // pred_region
        %p886 = scmp.lt.s32.totalorder %s17, 1
        %s887 = scalar_select %p886, %s17, 1
        %s888 = smul.addr %s887, 2
        %s889 = smul.addr %s888, 8
        %s890 = scalar_lea.vmem %s5, %s889
      $region52: #{generator_w1b_2layer.1} parent=47 // pred_fallthru
        _
    $region48: #{generator_w1b_2layer.1} parent=5 // pred_fallthru
      _
  $region6: #{generator_w1b_2layer.1} parent=0 // loop_footer
    %s15 = sadd.s32 1, %s11
  $region7: #{generator_w1b_2layer.1} parent=0 // loop_footer_branch
    %10 = sbr.rel target = $region3
  $region8: #{generator_w1b_2layer.1} parent=0 // loop_exit
    _

</llo_original>
